<compile_context>
chip_gen: v5e
topology: v5e:2x2
jax: 0.10.0
libtpu: 0.0.40
codegen_flags: <defaults>
</compile_context>

<pallas_src>
import jax
import jax.numpy as jnp
from jax.experimental import pallas as pl
from jax.experimental.pallas import tpu as pltpu

# ----- module constants (from the PyTorch spec) -------------------------------
BRANCH_CH = 32
OUT_CH = 3 * BRANCH_CH          # concat of 3 branches -> residual must also be 96
BN_EPS = 1e-5


# ----- Pallas kernel -----------------------------------------------------------
def _resblock_kernel(x_ref, w_ref, b_ref, out_ref):
    # x_ref:  (1, K, T)       stacked taps [x[2t-1]; x[2t]; x[2t+1]], K = 3*in_ch
    # w_ref:  (2*OUT_CH, K)   fused (BN-folded) weights: rows 0:96 branches, 96:192 residual
    # b_ref:  (2*OUT_CH, 1)   fused biases
    # out_ref:(1, OUT_CH, T)
    y = jnp.dot(
        w_ref[...], x_ref[0],
        preferred_element_type=jnp.float32,
        precision=jax.lax.Precision.HIGHEST,
    )                                        # (192, T) on the MXU
    y = y + b_ref[...]                       # lane-broadcast bias add
    branch = jnp.maximum(y[:OUT_CH, :], 0.0)       # relu(concat(b1, b2, b3))
    res = y[OUT_CH:, :]                            # residual path (no relu)
    out_ref[0] = jnp.maximum(branch + res, 0.0).astype(out_ref.dtype)


# ----- helpers -----------------------------------------------------------------
def _fold_bn(w, b, gamma, beta, mean, var, eps=BN_EPS):
    """Fold eval-mode BatchNorm1d into a preceding Conv1d."""
    scale = gamma / jnp.sqrt(var + eps)          # (Cout,)
    w_f = w * scale[:, None, None]               # (Cout, Cin, K)
    b_f = (b - mean) * scale + beta              # (Cout,)
    return w_f, b_f


def _build_fused_weights(params, in_ch):
    """Assemble one (192, 3*in_ch) weight matrix + (192,1) bias for the whole block."""
    cin = in_ch
    w1, b1 = _fold_bn(*params["b1"])             # (32, Cin, 1)
    w2, b2 = _fold_bn(*params["b2"])             # (32, Cin, 3)
    w3, b3 = _fold_bn(*params["b3"])             # (32, Cin, 1)
    wr, br = _fold_bn(*params["res"])            # (96, Cin, 1)

    K = 3 * cin
    W = jnp.zeros((2 * OUT_CH, K), jnp.float32)
    # tap layout along K: [left tap x[2t-1] | center tap x[2t] | right tap x[2t+1]]
    W = W.at[0:32, cin:2 * cin].set(w1[:, :, 0])           # branch1 (k=1) -> center
    W = W.at[32:64, 0:cin].set(w2[:, :, 0])                # branch2 k=3: left
    W = W.at[32:64, cin:2 * cin].set(w2[:, :, 1])          #              center
    W = W.at[32:64, 2 * cin:3 * cin].set(w2[:, :, 2])      #              right
    W = W.at[64:96, cin:2 * cin].set(w3[:, :, 0])          # branch3 (k=1) -> center
    W = W.at[96:192, cin:2 * cin].set(wr[:, :, 0])         # residual (k=1) -> center
    bias = jnp.concatenate([b1, b2, b3, br]).reshape(2 * OUT_CH, 1)
    return W, bias


def _choose_time_tile(lo, k, vmem_budget_bytes=8 * 1024 * 1024, max_lanes=4096):
    """Lane-dense time tile: multiple of 128, sized to a double-buffered VMEM budget."""
    k_pad = -(-k // 8) * 8                               # sublane padding of the input rows
    per_lane = (k_pad + OUT_CH) * 4 * 2                  # in + out blocks, double-buffered
    cap128 = max(1, vmem_budget_bytes // (per_lane * 128))
    cap128 = min(cap128, max_lanes // 128)
    lanes128 = max(1, -(-lo // 128))                     # ceil(lo / 128)
    t = 128 * min(lanes128, cap128)
    lo_p = -(-lo // t) * t                               # pad time up to a multiple of the tile
    return t, lo_p


# ----- wrapper -----------------------------------------------------------------
def residual_block_forward(x, params):
    """
    x: [batch, in_ch, L] float32
    returns [batch, 96, L_out] with L_out = floor((L-1)/2)+1  (same as the PyTorch module)
    """
    batch, cin, L = x.shape
    Lo = (L - 1) // 2 + 1
    K = 3 * cin

    # Gather the three stride-2 conv taps (only 2 elements of boundary padding).
    xp = jnp.pad(x, ((0, 0), (0, 0), (1, 1)))
    x_l = xp[:, :, 0::2][:, :, :Lo]     # x[2t-1]  (zero at t=0)
    x_c = xp[:, :, 1::2][:, :, :Lo]     # x[2t]
    x_r = xp[:, :, 2::2][:, :, :Lo]     # x[2t+1]  (zero past the end)
    x_stack = jnp.concatenate([x_l, x_c, x_r], axis=1).astype(jnp.float32)   # (B, K, Lo)

    W_big, bias = _build_fused_weights(params, cin)

    # Lane-dense time tiling (pad the time axis so every store is unmasked).
    TLo, Lo_p = _choose_time_tile(Lo, K)
    if Lo_p != Lo:
        x_stack = jnp.pad(x_stack, ((0, 0), (0, 0), (0, Lo_p - Lo)))

    grid = (batch, Lo_p // TLo)

    out = pl.pallas_call(
        _resblock_kernel,
        out_shape=jax.ShapeDtypeStruct((batch, OUT_CH, Lo_p), jnp.float32),
        grid_spec=pltpu.PrefetchScalarGridSpec(
            num_scalar_prefetch=0,
            grid=grid,
            in_specs=[
                pl.BlockSpec((1, K, TLo), lambda b, t: (b, 0, t)),        # stacked taps
                pl.BlockSpec((2 * OUT_CH, K), lambda b, t: (0, 0)),       # fused weights
                pl.BlockSpec((2 * OUT_CH, 1), lambda b, t: (0, 0)),       # fused bias
            ],
            out_specs=pl.BlockSpec((1, OUT_CH, TLo), lambda b, t: (b, 0, t)),
        ),
        compiler_params=pltpu.CompilerParams(
            dimension_semantics=("parallel", "parallel"),
        ),
    )(x_stack, W_big, bias)

    if Lo_p != Lo:
        out = out[:, :, :Lo]
    return out


# ----- parameter init (deterministic, PyTorch-like) ----------------------------
def init_params(key, in_ch):
    ks = jax.random.split(key, 12)

    def conv(kw, kb, cout, ksize):
        fan_in = in_ch * ksize
        bound = 1.0 / (fan_in ** 0.5)
        w = jax.random.uniform(kw, (cout, in_ch, ksize), jnp.float32, -bound, bound)
        b = jax.random.uniform(kb, (cout,), jnp.float32, -bound, bound)
        return w, b

    def bn(k, c):
        kg, kb, km, kv = jax.random.split(k, 4)
        gamma = jax.random.uniform(kg, (c,), jnp.float32, 0.5, 1.5)
        beta = jax.random.uniform(kb, (c,), jnp.float32, -0.5, 0.5)
        mean = 0.1 * jax.random.normal(km, (c,), jnp.float32)
        var = jax.random.uniform(kv, (c,), jnp.float32, 0.5, 1.5)
        return gamma, beta, mean, var

    return {
        "b1": conv(ks[0], ks[1], BRANCH_CH, 1) + bn(ks[2], BRANCH_CH),
        "b2": conv(ks[3], ks[4], BRANCH_CH, 3) + bn(ks[5], BRANCH_CH),
        "b3": conv(ks[6], ks[7], BRANCH_CH, 1) + bn(ks[8], BRANCH_CH),
        "res": conv(ks[9], ks[10], OUT_CH, 1) + bn(ks[11], OUT_CH),
    }


# ----- pure-JAX reference (eval-mode module semantics) --------------------------
def residual_block_ref(x, params):
    def conv1d(x, w, b, stride, padding):
        y = jax.lax.conv_general_dilated(
            x, w, window_strides=(stride,), padding=[(padding, padding)],
            dimension_numbers=("NCH", "OIH", "NCH"),
            precision=jax.lax.Precision.HIGHEST)
        return y + b[None, :, None]

    def bn(y, gamma, beta, mean, var):
        inv = 1.0 / jnp.sqrt(var + BN_EPS)
        return (y - mean[None, :, None]) * (gamma * inv)[None, :, None] + beta[None, :, None]

    w, b, g, be, m, v = params["res"]
    res = bn(conv1d(x, w, b, 2, 0), g, be, m, v)
    w, b, g, be, m, v = params["b1"]
    b1 = jax.nn.relu(bn(conv1d(x, w, b, 2, 0), g, be, m, v))
    w, b, g, be, m, v = params["b2"]
    b2 = jax.nn.relu(bn(conv1d(x, w, b, 2, 1), g, be, m, v))
    w, b, g, be, m, v = params["b3"]
    b3 = jax.nn.relu(bn(conv1d(x, w, b, 2, 0), g, be, m, v))
    concat = jnp.concatenate([b1, b2, b3], axis=1)
    return jax.nn.relu(concat + res)


if __name__ == "__main__":
    # TODO(synk): training-mode BatchNorm (running-stat updates) is not implemented;
    # the kernel realizes the eval/inference forward pass with BN folded into the convs.
    key = jax.random.PRNGKey(0)
    k_x, k_p = jax.random.split(key)

    batch, in_ch, L = 2, 4, 256           # L even -> L_out = 128 (lane-dense)
    x = jax.random.normal(k_x, (batch, in_ch, L), dtype=jnp.float32)
    params = init_params(k_p, in_ch)

    out = jax.jit(residual_block_forward)(x, params)
    out = jax.block_until_ready(out)

    ref = residual_block_ref(x, params)
    assert out.shape == (batch, OUT_CH, L // 2), out.shape
    max_err = float(jnp.max(jnp.abs(out - ref)))
    assert jnp.allclose(out, ref, rtol=1e-3, atol=1e-3), max_err

    print("KERNEL_OK")
</pallas_src>

<mosaic_0001>
module attributes {stable_mosaic.version = 11 : i64} {
  func.func @_resblock_kernel(%arg0: i32, %arg1: i32, %arg2: memref<1x12x128xf32, #tpu.memory_space<vmem>>, %arg3: memref<192x12xf32, #tpu.memory_space<vmem>>, %arg4: memref<192x1xf32, #tpu.memory_space<vmem>>, %arg5: memref<1x96x128xf32, #tpu.memory_space<vmem>>) attributes {dimension_semantics = [#tpu.dimension_semantics<parallel>, #tpu.dimension_semantics<parallel>], iteration_bounds = array<i64: 2, 1>, scalar_prefetch = 0 : i64, scratch_operands = 0 : i64, tpu.core_type = #tpu.core_type<tc>, window_params = [{transform_indices = @transform_0, window_bounds = array<i64: 1, 12, 128>}, {pipeline_mode = #tpu.pipeline_mode<synchronous>, transform_indices = @transform_1, window_bounds = array<i64: 192, 12>}, {pipeline_mode = #tpu.pipeline_mode<synchronous>, transform_indices = @transform_2, window_bounds = array<i64: 192, 1>}, {transform_indices = @transform_3, window_bounds = array<i64: 1, 96, 128>}]} {
    %c0 = arith.constant 0 : index
    %c0_0 = arith.constant 0 : index
    %0 = vector.load %arg3[%c0, %c0_0] : memref<192x12xf32, #tpu.memory_space<vmem>>, vector<192x12xf32>
    %c0_1 = arith.constant 0 : index
    %c0_2 = arith.constant 0 : index
    %c0_3 = arith.constant 0 : index
    %1 = vector.load %arg2[%c0_1, %c0_2, %c0_3] : memref<1x12x128xf32, #tpu.memory_space<vmem>>, vector<1x12x128xf32>
    %2 = vector.shape_cast %1 : vector<1x12x128xf32> to vector<12x128xf32>
    %cst = arith.constant dense<0.000000e+00> : vector<192x128xf32>
    %3 = tpu.matmul %0, %2, %cst {dimension_numbers = #tpu.dot_dimension_numbers<[1], [0], [0], [1], [0, 0, 1, 1], [], []>, precision = #tpu.contract_precision<fp32>} : vector<192x12xf32>, vector<12x128xf32>, vector<192x128xf32> -> vector<192x128xf32>
    %c0_4 = arith.constant 0 : index
    %c0_5 = arith.constant 0 : index
    %4 = vector.load %arg4[%c0_4, %c0_5] : memref<192x1xf32, #tpu.memory_space<vmem>>, vector<192x1xf32>
    %5 = vector.broadcast %4 : vector<192x1xf32> to vector<192x128xf32>
    %6 = arith.addf %3, %5 : vector<192x128xf32>
    %7 = vector.extract_strided_slice %6 {offsets = [0, 0], sizes = [96, 128], strides = [1, 1]} : vector<192x128xf32> to vector<96x128xf32>
    %cst_6 = arith.constant 0.000000e+00 : f32
    %8 = vector.broadcast %cst_6 : f32 to vector<96x128xf32>
    %9 = arith.maximumf %7, %8 : vector<96x128xf32>
    %10 = vector.extract_strided_slice %6 {offsets = [96, 0], sizes = [96, 128], strides = [1, 1]} : vector<192x128xf32> to vector<96x128xf32>
    %11 = arith.addf %9, %10 : vector<96x128xf32>
    %cst_7 = arith.constant 0.000000e+00 : f32
    %12 = vector.broadcast %cst_7 : f32 to vector<96x128xf32>
    %13 = arith.maximumf %11, %12 : vector<96x128xf32>
    %c0_8 = arith.constant 0 : index
    %c0_9 = arith.constant 0 : index
    %c0_10 = arith.constant 0 : index
    %14 = vector.load %arg5[%c0_8, %c0_9, %c0_10] : memref<1x96x128xf32, #tpu.memory_space<vmem>>, vector<1x96x128xf32>
    %15 = vector.shape_cast %14 : vector<1x96x128xf32> to vector<96x128xf32>
    %16 = vector.shape_cast %13 : vector<96x128xf32> to vector<1x96x128xf32>
    tpu.vector_store %arg5[%c0_8, %c0_9, %c0_10], %16 {strides = array<i32>} : memref<1x96x128xf32, #tpu.memory_space<vmem>>, vector<1x96x128xf32>,
    return
  }
  func.func @transform_0(%arg0: i32, %arg1: i32) -> (i32, i32, i32) {
    %c0_i32 = arith.constant 0 : i32
    %c0_i32_0 = arith.constant 0 : i32
    return %arg0, %c0_i32, %arg1 : i32, i32, i32
  }
  func.func @transform_1(%arg0: i32, %arg1: i32) -> (i32, i32) {
    %c0_i32 = arith.constant 0 : i32
    %c0_i32_0 = arith.constant 0 : i32
    %c0_i32_1 = arith.constant 0 : i32
    return %c0_i32, %c0_i32_0 : i32, i32
  }
  func.func @transform_2(%arg0: i32, %arg1: i32) -> (i32, i32) {
    %c0_i32 = arith.constant 0 : i32
    %c0_i32_0 = arith.constant 0 : i32
    %c0_i32_1 = arith.constant 0 : i32
    return %c0_i32, %c0_i32_0 : i32, i32
  }
  func.func @transform_3(%arg0: i32, %arg1: i32) -> (i32, i32, i32) {
    %c0_i32 = arith.constant 0 : i32
    %c0_i32_0 = arith.constant 0 : i32
    return %arg0, %c0_i32, %arg1 : i32, i32, i32
  }
}

</mosaic_0001>

<llo_original>
// kernel: residual_block_forward.1
$region0: #{residual_block_forward.1}
  #allocation0 [shape = 'u32[]', space=smem, size = 0x4, offset = 0x4, fixed_abs, tag = 'smem constant byte address 0x4 - core index']
  #allocation1 [shape = 'u32[72,128]{1,0:T(1,128)}', space=vmem, size = 0x9000, scoped, tag = 'internal scratch']
  %s0 = inlined_call_operand.vmem [shape: f32[2,12,128], index: 0, kind: input, shape index: {}]
  %s1 = inlined_call_operand.vmem [shape: f32[192,12], index: 1, kind: input, shape index: {}]
  %s2 = inlined_call_operand.vmem [shape: f32[192,1], index: 2, kind: input, shape index: {}]
  %s3 = inlined_call_operand.hbm [shape: f32[2,96,128], index: 3, kind: output, shape index: {}]
  %s4 = sld [smem:[#allocation0]]
  $region45: #{residual_block_forward.1} parent=0
    _
  %s6 = ssub.s32 1, %s4
  %s7 = scalar_select 0, %s6, %s4
  $region1: #{residual_block_forward.1} parent=0
    #allocation2 [shape = 'u8[98304]{0}', space=vmem, size = 0x18000, scoped, tag = 'output window, operand 0']
    #allocation3 [shape = 's32[2]{0}', space=sflag, size = 0x8, scoped, tag = 'scoped memory for residual_block_forward.1']
    %8 = vsyncpa [#allocation3], 0
    %s9 = scalar_lea.sflag [#allocation3], 1
    %10 = vsyncpa %s9, 0
    loop: start=0, step=1, limit=4
    $region2: #{residual_block_forward.1} parent=1 // loop_pre_header
      _
    $region3: #{residual_block_forward.1} parent=1 // loop_header
      %s12 = sphi 0, %s16
      %p13 = scmp.ge.s32.totalorder %s12, 4
      %s19 = sphi 0, %s31
      %s20 = sphi 0, %s27
      %s21 = sphi 0, %s19
      %s22 = sphi 0, %s20
      %s23 = sphi 0, %s21
      %s24 = sphi 0, %s22
      %s36 = sphi 0, %s38
      %s39 = sphi 0, %s36
      %s40 = sphi 0, %s39
      %s56 = sphi 0, %s40
      %s60 = sphi 0, %s60
      %s62 = sphi 0, %s60
      %s63 = sphi 0, %s62
      %s77 = sphi 0, %s63
      %s81 = sphi 0, %s81
      %s83 = sphi 0, %s81
      %s84 = sphi 0, %s83
      %s98 = sphi 0, %s84
      %s106 = sphi 0, %s108
      %s109 = sphi 0, %s106
      %s110 = sphi 0, %s109
      %s126 = sphi 0, %s110
    $region4: #{residual_block_forward.1} parent=1 // loop_header_branch
      %15 = sbr.rel (%p13) target = $region8
    $region5: #{residual_block_forward.1} parent=1 // loop_body
      %s17 = ssub.s32 %s12, 1
      %s18 = ssub.s32 %s12, 2
      %s25 = sadd.s32 1, %s20
      %p26 = scmp.ge.s32.totalorder %s25, 1
      %s27 = scalar_select %p26, 0, %s25
      %s28 = sadd.s32 1, %s19
      %s29 = scalar_select %p26, %s28, %s19
      %p30 = scmp.ge.s32.totalorder %s29, 2
      %s31 = scalar_select %p30, 0, %s29
      %s32 = ssub.s32 %s19, %s31
      %s33 = ssub.s32 %s20, %s27
      %s34 = sor.u32 %s32, %s33
      %p35 = scmp.eq.s32.totalorder %s34, 0
      %s37 = sadd.s32 %s36, 1
      %s38 = scalar_select %p35, %s36, %s37
      %p41 = pneg %p35
      %p42 = scmp.eq.s32.totalorder %s12, 1
      %p43 = por %p41, %p42
      %p44 = scmp.ne.s32.totalorder %s36, %s39
      %p45 = scmp.eq.s32.totalorder %s12, 0
      %p46 = por %p44, %p45
      %p47 = scmp.ne.s32.totalorder %s36, %s39
      %p48 = scmp.eq.s32.totalorder %s17, 1
      %p49 = por %p47, %p48
      %p50 = scmp.ne.s32.totalorder %s39, %s40
      %p51 = scmp.eq.s32.totalorder %s17, 0
      %p52 = por %p50, %p51
      %p53 = scmp.ne.s32.totalorder %s39, %s40
      %p54 = scmp.eq.s32.totalorder %s18, 1
      %p55 = por %p53, %p54
      %p57 = scmp.ne.s32.totalorder %s40, %s56
      %p58 = scmp.eq.s32.totalorder %s18, 0
      %p59 = por %p57, %p58
      %s61 = sadd.s32 %s60, 1
      %p64 = scmp.eq.s32.totalorder %s12, 1
      %p65 = scmp.ne.s32.totalorder %s60, %s62
      %p66 = scmp.eq.s32.totalorder %s12, 0
      %p67 = por %p65, %p66
      %p68 = scmp.ne.s32.totalorder %s60, %s62
      %p69 = scmp.eq.s32.totalorder %s17, 1
      %p70 = por %p68, %p69
      %p71 = scmp.ne.s32.totalorder %s62, %s63
      %p72 = scmp.eq.s32.totalorder %s17, 0
      %p73 = por %p71, %p72
      %p74 = scmp.ne.s32.totalorder %s62, %s63
      %p75 = scmp.eq.s32.totalorder %s18, 1
      %p76 = por %p74, %p75
      %p78 = scmp.ne.s32.totalorder %s63, %s77
      %p79 = scmp.eq.s32.totalorder %s18, 0
      %p80 = por %p78, %p79
      %s82 = sadd.s32 %s81, 1
      %p85 = scmp.eq.s32.totalorder %s12, 1
      %p86 = scmp.ne.s32.totalorder %s81, %s83
      %p87 = scmp.eq.s32.totalorder %s12, 0
      %p88 = por %p86, %p87
      %p89 = scmp.ne.s32.totalorder %s81, %s83
      %p90 = scmp.eq.s32.totalorder %s17, 1
      %p91 = por %p89, %p90
      %p92 = scmp.ne.s32.totalorder %s83, %s84
      %p93 = scmp.eq.s32.totalorder %s17, 0
      %p94 = por %p92, %p93
      %p95 = scmp.ne.s32.totalorder %s83, %s84
      %p96 = scmp.eq.s32.totalorder %s18, 1
      %p97 = por %p95, %p96
      %p99 = scmp.ne.s32.totalorder %s84, %s98
      %p100 = scmp.eq.s32.totalorder %s18, 0
      %p101 = por %p99, %p100
      %s102 = ssub.s32 %s19, %s31
      %s103 = ssub.s32 %s20, %s27
      %s104 = sor.u32 %s102, %s103
      %p105 = scmp.eq.s32.totalorder %s104, 0
      %s107 = sadd.s32 %s106, 1
      %s108 = scalar_select %p105, %s106, %s107
      %p111 = pneg %p105
      %p112 = scmp.eq.s32.totalorder %s12, 1
      %p113 = por %p111, %p112
      %p114 = scmp.ne.s32.totalorder %s106, %s109
      %p115 = scmp.eq.s32.totalorder %s12, 0
      %p116 = por %p114, %p115
      %p117 = scmp.ne.s32.totalorder %s106, %s109
      %p118 = scmp.eq.s32.totalorder %s17, 1
      %p119 = por %p117, %p118
      %p120 = scmp.ne.s32.totalorder %s109, %s110
      %p121 = scmp.eq.s32.totalorder %s17, 0
      %p122 = por %p120, %p121
      %p123 = scmp.ne.s32.totalorder %s109, %s110
      %p124 = scmp.eq.s32.totalorder %s18, 1
      %p125 = por %p123, %p124
      %p127 = scmp.ne.s32.totalorder %s110, %s126
      %p128 = scmp.eq.s32.totalorder %s18, 0
      %p129 = por %p127, %p128
      %p130 = scmp.le.s32.totalorder 1, %s12
      %p131 = scmp.lt.s32.totalorder %s12, 3
      %p132 = pnand %p130, %p131
      %p133 = pneg %p132
      // Predicated region
      $region9: #{residual_block_forward.1} parent=5 // pred_check
        _
      $region10: #{residual_block_forward.1} parent=5 // pred_check_branch
        %135 = sbr.rel (%p132) target = $region12
      $region11: #{residual_block_forward.1} parent=5 // pred_region
        %s136 = ssub.s32 %s12, 1
        // Predicated region
        $region13: #{residual_block_forward.1} parent=11 // pred_check
          %p137 = pneg %p73
        $region14: #{residual_block_forward.1} parent=11 // pred_check_branch
          %139 = sbr.rel (%p137) target = $region16
        $region15: #{residual_block_forward.1} parent=11 // pred_region
          _
        $region16: #{residual_block_forward.1} parent=11 // pred_fallthru
          _
        // Predicated region
        $region17: #{residual_block_forward.1} parent=11 // pred_check
          %p140 = pneg %p94
        $region18: #{residual_block_forward.1} parent=11 // pred_check_branch
          %142 = sbr.rel (%p140) target = $region20
        $region19: #{residual_block_forward.1} parent=11 // pred_region
          _
        $region20: #{residual_block_forward.1} parent=11 // pred_fallthru
          _
      $region12: #{residual_block_forward.1} parent=5 // pred_fallthru
        _
      %p143 = scmp.lt.s32.totalorder %s12, 2
      // Predicated region
      $region21: #{residual_block_forward.1} parent=5 // pred_check
        %p144 = pneg %p143
      $region22: #{residual_block_forward.1} parent=5 // pred_check_branch
        %146 = sbr.rel (%p144) target = $region24
      $region23: #{residual_block_forward.1} parent=5 // pred_region
        // Predicated region
        $region25: #{residual_block_forward.1} parent=23 // pred_check
          %p147 = pneg %p46
        $region26: #{residual_block_forward.1} parent=23 // pred_check_branch
          %149 = sbr.rel (%p147) target = $region28
        $region27: #{residual_block_forward.1} parent=23 // pred_region
          %p150 = scmp.lt.s32.totalorder %s19, 1
          %s151 = scalar_select %p150, %s19, 1
          %p152 = scmp.lt.s32.totalorder %s20, 0
          %s153 = scalar_select %p152, %s20, 0
          %s154 = smul.addr %s151, 2
          %s155 = sadd.s32 %s153, %s154
          %s156 = smul.addr %s155, 8
          %s157 = scalar_lea.vmem %s0, %s156
        $region28: #{residual_block_forward.1} parent=23 // pred_fallthru
          _
      $region24: #{residual_block_forward.1} parent=5 // pred_fallthru
        _
      %p158 = scmp.le.s32.totalorder 1, %s12
      %p159 = scmp.lt.s32.totalorder %s12, 3
      %p160 = pnand %p158, %p159
      %p161 = pneg %p160
      // Predicated region
      $region29: #{residual_block_forward.1} parent=5 // pred_check
        _
      $region30: #{residual_block_forward.1} parent=5 // pred_check_branch
        %163 = sbr.rel (%p160) target = $region32
      $region31: #{residual_block_forward.1} parent=5 // pred_region
        %s164 = ssub.s32 %s12, 1
        %p165 = scmp.lt.s32.totalorder %s21, 1
        %s166 = scalar_select %p165, %s21, 1
        %p167 = scmp.lt.s32.totalorder %s22, 0
        %s168 = scalar_select %p167, %s22, 0
        %s169 = smul.addr %s166, 2
        %s170 = sadd.s32 %s168, %s169
        %s171 = smul.addr %s170, 8
        %s172 = scalar_lea.vmem %s0, %s171
        %p173 = pneg %p52
        %p174 = pneg %p49
        %p175 = pneg %p73
        %p176 = pneg %p70
        %p177 = pneg %p94
        %p178 = pneg %p91
        %p179 = pneg %p122
        %p180 = pneg %p119
        %s181 = sand.u32 %s109, 1
        %s182 = scalar_lea.sflag [#allocation3], %s181
        %s183 = sand.u32 %s109, 1
        %s184 = smul.addr %s183, 96
        %s185 = scalar_lea.vmem [#allocation2], %s184
        %p186 = scmp.lt.s32.totalorder %s21, 1
        %s187 = scalar_select %p186, %s21, 1
        %p188 = scmp.lt.s32.totalorder %s22, 0
        %s189 = scalar_select %p188, %s22, 0
        %s190 = smul.addr %s187, 2
        %s191 = sadd.s32 %s189, %s190
        %s192 = smul.addr %s191, 8
        %s193 = scalar_lea.vmem %s0, %s192
        %v194 = vld [vmem:[%s1] sm:$0xff]
        %v195 = vld [vmem:[%s1 + $0x8] sm:$0xff]
        %v196 = vld [vmem:[%s1 + $0x10] sm:$0xff]
        %v197 = vld [vmem:[%s1 + $0x18] sm:$0xff]
        %v198 = vld [vmem:[%s1 + $0x20] sm:$0xff]
        %v199 = vld [vmem:[%s1 + $0x28] sm:$0xff]
        %v200 = vld [vmem:[%s1 + $0x30] sm:$0xff]
        %v201 = vld [vmem:[%s1 + $0x38] sm:$0xff]
        %v202 = vld [vmem:[%s1 + $0x40] sm:$0xff]
        %v203 = vld [vmem:[%s1 + $0x48] sm:$0xff]
        %v204 = vld [vmem:[%s1 + $0x50] sm:$0xff]
        %v205 = vld [vmem:[%s1 + $0x58] sm:$0xff]
        %v206 = vld [vmem:[%s1 + $0x60] sm:$0xff]
        %v207 = vld [vmem:[%s1 + $0x68] sm:$0xff]
        %v208 = vld [vmem:[%s1 + $0x70] sm:$0xff]
        %v209 = vld [vmem:[%s1 + $0x78] sm:$0xff]
        %v210 = vld [vmem:[%s1 + $0x80] sm:$0xff]
        %v211 = vld [vmem:[%s1 + $0x88] sm:$0xff]
        %v212 = vld [vmem:[%s1 + $0x90] sm:$0xff]
        %v213 = vld [vmem:[%s1 + $0x98] sm:$0xff]
        %v214 = vld [vmem:[%s1 + $0xa0] sm:$0xff]
        %v215 = vld [vmem:[%s1 + $0xa8] sm:$0xff]
        %v216 = vld [vmem:[%s1 + $0xb0] sm:$0xff]
        %v217 = vld [vmem:[%s1 + $0xb8] sm:$0xff]
        %v218 = vld [vmem:[%s193] sm:$0xff]
        %v219 = vld [vmem:[%s193 + $0x8] sm:$0xf]
        %v220 = vld [vmem:[%s2] sm:$0xff]
        %v221 = vld [vmem:[%s2 + $0x8] sm:$0xff]
        %v222 = vld [vmem:[%s2 + $0x10] sm:$0xff]
        %v223 = vld [vmem:[%s2 + $0x18] sm:$0xff]
        %v224 = vld [vmem:[%s2 + $0x20] sm:$0xff]
        %v225 = vld [vmem:[%s2 + $0x28] sm:$0xff]
        %v226 = vld [vmem:[%s2 + $0x30] sm:$0xff]
        %v227 = vld [vmem:[%s2 + $0x38] sm:$0xff]
        %v228 = vld [vmem:[%s2 + $0x40] sm:$0xff]
        %v229 = vld [vmem:[%s2 + $0x48] sm:$0xff]
        %v230 = vld [vmem:[%s2 + $0x50] sm:$0xff]
        %v231 = vld [vmem:[%s2 + $0x58] sm:$0xff]
        %v232 = vld [vmem:[%s2 + $0x60] sm:$0xff]
        %v233 = vld [vmem:[%s2 + $0x68] sm:$0xff]
        %v234 = vld [vmem:[%s2 + $0x70] sm:$0xff]
        %v235 = vld [vmem:[%s2 + $0x78] sm:$0xff]
        %v236 = vld [vmem:[%s2 + $0x80] sm:$0xff]
        %v237 = vld [vmem:[%s2 + $0x88] sm:$0xff]
        %v238 = vld [vmem:[%s2 + $0x90] sm:$0xff]
        %v239 = vld [vmem:[%s2 + $0x98] sm:$0xff]
        %v240 = vld [vmem:[%s2 + $0xa0] sm:$0xff]
        %v241 = vld [vmem:[%s2 + $0xa8] sm:$0xff]
        %v242 = vld [vmem:[%s2 + $0xb0] sm:$0xff]
        %v243 = vld [vmem:[%s2 + $0xb8] sm:$0xff]
        %245 = vset.pattern.permute.xlu0 0
        %246 = vperm.xlu0 %245, %v220
        %v247 = vpop.permute.xlu0 %246
        %250 = vset.pattern.permute.xlu0 0
        %251 = vperm.xlu0 %250, %v221
        %v252 = vpop.permute.xlu0 %251
        %255 = vset.pattern.permute.xlu0 0
        %256 = vperm.xlu0 %255, %v222
        %v257 = vpop.permute.xlu0 %256
        %260 = vset.pattern.permute.xlu0 0
        %261 = vperm.xlu0 %260, %v223
        %v262 = vpop.permute.xlu0 %261
        %265 = vset.pattern.permute.xlu0 0
        %266 = vperm.xlu0 %265, %v224
        %v267 = vpop.permute.xlu0 %266
        %270 = vset.pattern.permute.xlu0 0
        %271 = vperm.xlu0 %270, %v225
        %v272 = vpop.permute.xlu0 %271
        %275 = vset.pattern.permute.xlu0 0
        %276 = vperm.xlu0 %275, %v226
        %v277 = vpop.permute.xlu0 %276
        %280 = vset.pattern.permute.xlu0 0
        %281 = vperm.xlu0 %280, %v227
        %v282 = vpop.permute.xlu0 %281
        %285 = vset.pattern.permute.xlu0 0
        %286 = vperm.xlu0 %285, %v228
        %v287 = vpop.permute.xlu0 %286
        %290 = vset.pattern.permute.xlu0 0
        %291 = vperm.xlu0 %290, %v229
        %v292 = vpop.permute.xlu0 %291
        %295 = vset.pattern.permute.xlu0 0
        %296 = vperm.xlu0 %295, %v230
        %v297 = vpop.permute.xlu0 %296
        %300 = vset.pattern.permute.xlu0 0
        %301 = vperm.xlu0 %300, %v231
        %v302 = vpop.permute.xlu0 %301
        %305 = vset.pattern.permute.xlu0 0
        %306 = vperm.xlu0 %305, %v232
        %v307 = vpop.permute.xlu0 %306
        %310 = vset.pattern.permute.xlu0 0
        %311 = vperm.xlu0 %310, %v233
        %v312 = vpop.permute.xlu0 %311
        %315 = vset.pattern.permute.xlu0 0
        %316 = vperm.xlu0 %315, %v234
        %v317 = vpop.permute.xlu0 %316
        %320 = vset.pattern.permute.xlu0 0
        %321 = vperm.xlu0 %320, %v235
        %v322 = vpop.permute.xlu0 %321
        %325 = vset.pattern.permute.xlu0 0
        %326 = vperm.xlu0 %325, %v236
        %v327 = vpop.permute.xlu0 %326
        %330 = vset.pattern.permute.xlu0 0
        %331 = vperm.xlu0 %330, %v237
        %v332 = vpop.permute.xlu0 %331
        %335 = vset.pattern.permute.xlu0 0
        %336 = vperm.xlu0 %335, %v238
        %v337 = vpop.permute.xlu0 %336
        %340 = vset.pattern.permute.xlu0 0
        %341 = vperm.xlu0 %340, %v239
        %v342 = vpop.permute.xlu0 %341
        %345 = vset.pattern.permute.xlu0 0
        %346 = vperm.xlu0 %345, %v240
        %v347 = vpop.permute.xlu0 %346
        %350 = vset.pattern.permute.xlu0 0
        %351 = vperm.xlu0 %350, %v241
        %v352 = vpop.permute.xlu0 %351
        %355 = vset.pattern.permute.xlu0 0
        %356 = vperm.xlu0 %355, %v242
        %v357 = vpop.permute.xlu0 %356
        %360 = vset.pattern.permute.xlu0 0
        %361 = vperm.xlu0 %360, %v243
        %v362 = vpop.permute.xlu0 %361
        %vm364 = vcmask 97280
        %v366 = vsel %vm364, %v194, 0
        %v369 = vsel %vm364, %v195, 0
        %v372 = vsel %vm364, %v196, 0
        %v375 = vsel %vm364, %v197, 0
        %v378 = vsel %vm364, %v198, 0
        %v381 = vsel %vm364, %v199, 0
        %v384 = vsel %vm364, %v200, 0
        %v387 = vsel %vm364, %v201, 0
        %v390 = vsel %vm364, %v202, 0
        %v393 = vsel %vm364, %v203, 0
        %v396 = vsel %vm364, %v204, 0
        %v399 = vsel %vm364, %v205, 0
        %v402 = vsel %vm364, %v206, 0
        %v405 = vsel %vm364, %v207, 0
        %v408 = vsel %vm364, %v208, 0
        %v411 = vsel %vm364, %v209, 0
        %v414 = vsel %vm364, %v210, 0
        %v417 = vsel %vm364, %v211, 0
        %v420 = vsel %vm364, %v212, 0
        %v423 = vsel %vm364, %v213, 0
        %v426 = vsel %vm364, %v214, 0
        %v429 = vsel %vm364, %v215, 0
        %v432 = vsel %vm364, %v216, 0
        %v435 = vsel %vm364, %v217, 0
        %vm437 = vcmask 1043456
        %v439 = vsel %vm437, %v219, 0
        %441 = vmatpush.msra.mxu0 0.0
        %442 = vmatpush.msra.mxu0 0.0
        %443 = vmatpush.msra.mxu0 0.0
        %444 = vmatpush.msra.mxu0 0.0
        %445 = vmatpush.msra.mxu0 0.0
        %446 = vmatpush.msra.mxu0 0.0
        %447 = vmatpush.msra.mxu0 0.0
        %448 = vmatpush.msra.mxu0 0.0
        %449 = vmatpush.msra.mxu0 0.0
        %450 = vmatpush.msra.mxu0 0.0
        %451 = vmatpush.msra.mxu0 0.0
        %452 = vmatpush.msra.mxu0 0.0
        %453 = vmatpush.msra.mxu0 0.0
        %454 = vmatpush.msra.mxu0 0.0
        %v455 = vand.u32 %v439, 4294901760
        %456 = vmatpush.msra.mxu0 %v455
        %v457 = vand.u32 %v218, 4294901760
        %458 = vmatpush.msra.mxu0 %v457
        %v459 = vand.u32 %v366, 4294901760
        %v460 = vsub.f32 %v366, %v459
        %v461 = vand.u32 %v460, 4294901760
        %v462 = vsub.f32 %v460, %v461
        %v463 = vand.u32 %v462, 4294901760
        %464 = vmatmul.f32.gmra.mxu0 %v463
        %v465 = vpop.f32.mrf.mxu0
        %v466 = vadd.f32 %v247, %v465
        %v467 = vand.u32 %v369, 4294901760
        %v468 = vsub.f32 %v369, %v467
        %v469 = vand.u32 %v468, 4294901760
        %v470 = vsub.f32 %v468, %v469
        %v471 = vand.u32 %v470, 4294901760
        %472 = vmatmul.f32.gmra.mxu0 %v471
        %v473 = vpop.f32.mrf.mxu0
        %v474 = vadd.f32 %v252, %v473
        %v475 = vand.u32 %v372, 4294901760
        %v476 = vsub.f32 %v372, %v475
        %v477 = vand.u32 %v476, 4294901760
        %v478 = vsub.f32 %v476, %v477
        %v479 = vand.u32 %v478, 4294901760
        %480 = vmatmul.f32.gmra.mxu0 %v479
        %v481 = vpop.f32.mrf.mxu0
        %v482 = vadd.f32 %v257, %v481
        %v483 = vand.u32 %v375, 4294901760
        %v484 = vsub.f32 %v375, %v483
        %v485 = vand.u32 %v484, 4294901760
        %v486 = vsub.f32 %v484, %v485
        %v487 = vand.u32 %v486, 4294901760
        %488 = vmatmul.f32.gmra.mxu0 %v487
        %v489 = vpop.f32.mrf.mxu0
        %v490 = vadd.f32 %v262, %v489
        %v491 = vand.u32 %v378, 4294901760
        %v492 = vsub.f32 %v378, %v491
        %v493 = vand.u32 %v492, 4294901760
        %v494 = vsub.f32 %v492, %v493
        %v495 = vand.u32 %v494, 4294901760
        %496 = vmatmul.f32.gmra.mxu0 %v495
        %v497 = vpop.f32.mrf.mxu0
        %v498 = vadd.f32 %v267, %v497
        %v499 = vand.u32 %v381, 4294901760
        %v500 = vsub.f32 %v381, %v499
        %v501 = vand.u32 %v500, 4294901760
        %v502 = vsub.f32 %v500, %v501
        %v503 = vand.u32 %v502, 4294901760
        %504 = vmatmul.f32.gmra.mxu0 %v503
        %v505 = vpop.f32.mrf.mxu0
        %v506 = vadd.f32 %v272, %v505
        %v507 = vand.u32 %v384, 4294901760
        %v508 = vsub.f32 %v384, %v507
        %v509 = vand.u32 %v508, 4294901760
        %v510 = vsub.f32 %v508, %v509
        %v511 = vand.u32 %v510, 4294901760
        %512 = vmatmul.f32.gmra.mxu0 %v511
        %v513 = vpop.f32.mrf.mxu0
        %v514 = vadd.f32 %v277, %v513
        %v515 = vand.u32 %v387, 4294901760
        %v516 = vsub.f32 %v387, %v515
        %v517 = vand.u32 %v516, 4294901760
        %v518 = vsub.f32 %v516, %v517
        %v519 = vand.u32 %v518, 4294901760
        %520 = vmatmul.f32.gmra.mxu0 %v519
        %v521 = vpop.f32.mrf.mxu0
        %v522 = vadd.f32 %v282, %v521
        %v523 = vand.u32 %v390, 4294901760
        %v524 = vsub.f32 %v390, %v523
        %v525 = vand.u32 %v524, 4294901760
        %v526 = vsub.f32 %v524, %v525
        %v527 = vand.u32 %v526, 4294901760
        %528 = vmatmul.f32.gmra.mxu0 %v527
        %v529 = vpop.f32.mrf.mxu0
        %v530 = vadd.f32 %v287, %v529
        %v531 = vand.u32 %v393, 4294901760
        %v532 = vsub.f32 %v393, %v531
        %v533 = vand.u32 %v532, 4294901760
        %v534 = vsub.f32 %v532, %v533
        %v535 = vand.u32 %v534, 4294901760
        %536 = vmatmul.f32.gmra.mxu0 %v535
        %v537 = vpop.f32.mrf.mxu0
        %v538 = vadd.f32 %v292, %v537
        %v539 = vand.u32 %v396, 4294901760
        %v540 = vsub.f32 %v396, %v539
        %v541 = vand.u32 %v540, 4294901760
        %v542 = vsub.f32 %v540, %v541
        %v543 = vand.u32 %v542, 4294901760
        %544 = vmatmul.f32.gmra.mxu0 %v543
        %v545 = vpop.f32.mrf.mxu0
        %v546 = vadd.f32 %v297, %v545
        %v547 = vand.u32 %v399, 4294901760
        %v548 = vsub.f32 %v399, %v547
        %v549 = vand.u32 %v548, 4294901760
        %v550 = vsub.f32 %v548, %v549
        %v551 = vand.u32 %v550, 4294901760
        %552 = vmatmul.f32.gmra.mxu0 %v551
        %v553 = vpop.f32.mrf.mxu0
        %v554 = vadd.f32 %v302, %v553
        %v555 = vand.u32 %v402, 4294901760
        %v556 = vsub.f32 %v402, %v555
        %v557 = vand.u32 %v556, 4294901760
        %v558 = vsub.f32 %v556, %v557
        %v559 = vand.u32 %v558, 4294901760
        %560 = vmatmul.f32.gmra.mxu0 %v559
        %v561 = vpop.f32.mrf.mxu0
        %v562 = vadd.f32 %v307, %v561
        %v563 = vand.u32 %v405, 4294901760
        %v564 = vsub.f32 %v405, %v563
        %v565 = vand.u32 %v564, 4294901760
        %v566 = vsub.f32 %v564, %v565
        %v567 = vand.u32 %v566, 4294901760
        %568 = vmatmul.f32.gmra.mxu0 %v567
        %v569 = vpop.f32.mrf.mxu0
        %v570 = vadd.f32 %v312, %v569
        %v571 = vand.u32 %v408, 4294901760
        %v572 = vsub.f32 %v408, %v571
        %v573 = vand.u32 %v572, 4294901760
        %v574 = vsub.f32 %v572, %v573
        %v575 = vand.u32 %v574, 4294901760
        %576 = vmatmul.f32.gmra.mxu0 %v575
        %v577 = vpop.f32.mrf.mxu0
        %v578 = vadd.f32 %v317, %v577
        %v579 = vand.u32 %v411, 4294901760
        %v580 = vsub.f32 %v411, %v579
        %v581 = vand.u32 %v580, 4294901760
        %v582 = vsub.f32 %v580, %v581
        %v583 = vand.u32 %v582, 4294901760
        %584 = vmatmul.f32.gmra.mxu0 %v583
        %v585 = vpop.f32.mrf.mxu0
        %v586 = vadd.f32 %v322, %v585
        %v587 = vand.u32 %v414, 4294901760
        %v588 = vsub.f32 %v414, %v587
        %v589 = vand.u32 %v588, 4294901760
        %v590 = vsub.f32 %v588, %v589
        %v591 = vand.u32 %v590, 4294901760
        %592 = vmatmul.f32.gmra.mxu0 %v591
        %v593 = vpop.f32.mrf.mxu0
        %v594 = vadd.f32 %v327, %v593
        %v595 = vand.u32 %v417, 4294901760
        %v596 = vsub.f32 %v417, %v595
        %v597 = vand.u32 %v596, 4294901760
        %v598 = vsub.f32 %v596, %v597
        %v599 = vand.u32 %v598, 4294901760
        %600 = vmatmul.f32.gmra.mxu0 %v599
        %v601 = vpop.f32.mrf.mxu0
        %v602 = vadd.f32 %v332, %v601
        %v603 = vand.u32 %v420, 4294901760
        %v604 = vsub.f32 %v420, %v603
        %v605 = vand.u32 %v604, 4294901760
        %v606 = vsub.f32 %v604, %v605
        %v607 = vand.u32 %v606, 4294901760
        %608 = vmatmul.f32.gmra.mxu0 %v607
        %v609 = vpop.f32.mrf.mxu0
        %v610 = vadd.f32 %v337, %v609
        %v611 = vand.u32 %v423, 4294901760
        %v612 = vsub.f32 %v423, %v611
        %v613 = vand.u32 %v612, 4294901760
        %v614 = vsub.f32 %v612, %v613
        %v615 = vand.u32 %v614, 4294901760
        %616 = vmatmul.f32.gmra.mxu0 %v615
        %v617 = vpop.f32.mrf.mxu0
        %v618 = vadd.f32 %v342, %v617
        %v619 = vand.u32 %v426, 4294901760
        %v620 = vsub.f32 %v426, %v619
        %v621 = vand.u32 %v620, 4294901760
        %v622 = vsub.f32 %v620, %v621
        %v623 = vand.u32 %v622, 4294901760
        %624 = vmatmul.f32.gmra.mxu0 %v623
        %v625 = vpop.f32.mrf.mxu0
        %v626 = vadd.f32 %v347, %v625
        %v627 = vand.u32 %v429, 4294901760
        %v628 = vsub.f32 %v429, %v627
        %v629 = vand.u32 %v628, 4294901760
        %v630 = vsub.f32 %v628, %v629
        %v631 = vand.u32 %v630, 4294901760
        %632 = vmatmul.f32.gmra.mxu0 %v631
        %v633 = vpop.f32.mrf.mxu0
        %v634 = vadd.f32 %v352, %v633
        %v635 = vand.u32 %v432, 4294901760
        %v636 = vsub.f32 %v432, %v635
        %v637 = vand.u32 %v636, 4294901760
        %v638 = vsub.f32 %v636, %v637
        %v639 = vand.u32 %v638, 4294901760
        %640 = vmatmul.f32.gmra.mxu0 %v639
        %v641 = vpop.f32.mrf.mxu0
        %v642 = vadd.f32 %v357, %v641
        %v643 = vand.u32 %v435, 4294901760
        %v644 = vsub.f32 %v435, %v643
        %v645 = vand.u32 %v644, 4294901760
        %v646 = vsub.f32 %v644, %v645
        %v647 = vand.u32 %v646, 4294901760
        %648 = vmatmul.f32.gmra.mxu0 %v647
        %v649 = vpop.f32.mrf.mxu0
        %v650 = vadd.f32 %v362, %v649
        %651 = vdwg.mxu0
        %652 = vmatpush.msra.mxu0 0.0
        %653 = vmatpush.msra.mxu0 0.0
        %654 = vmatpush.msra.mxu0 0.0
        %655 = vmatpush.msra.mxu0 0.0
        %656 = vmatpush.msra.mxu0 0.0
        %657 = vmatpush.msra.mxu0 0.0
        %658 = vmatpush.msra.mxu0 0.0
        %659 = vmatpush.msra.mxu0 0.0
        %660 = vmatpush.msra.mxu0 0.0
        %661 = vmatpush.msra.mxu0 0.0
        %662 = vmatpush.msra.mxu0 0.0
        %663 = vmatpush.msra.mxu0 0.0
        %664 = vmatpush.msra.mxu0 0.0
        %665 = vmatpush.msra.mxu0 0.0
        %v666 = vand.u32 %v439, 4294901760
        %v667 = vsub.f32 %v439, %v666
        %v668 = vand.u32 %v667, 4294901760
        %v669 = vsub.f32 %v667, %v668
        %v670 = vand.u32 %v669, 4294901760
        %671 = vmatpush.msra.mxu0 %v670
        %v672 = vand.u32 %v218, 4294901760
        %v673 = vsub.f32 %v218, %v672
        %v674 = vand.u32 %v673, 4294901760
        %v675 = vsub.f32 %v673, %v674
        %v676 = vand.u32 %v675, 4294901760
        %677 = vmatpush.msra.mxu0 %v676
        %v678 = vand.u32 %v366, 4294901760
        %679 = vmatmul.f32.gmra.mxu0 %v678
        %v680 = vpop.f32.mrf.mxu0
        %v681 = vadd.f32 %v466, %v680
        %v682 = vand.u32 %v369, 4294901760
        %683 = vmatmul.f32.gmra.mxu0 %v682
        %v684 = vpop.f32.mrf.mxu0
        %v685 = vadd.f32 %v474, %v684
        %v686 = vand.u32 %v372, 4294901760
        %687 = vmatmul.f32.gmra.mxu0 %v686
        %v688 = vpop.f32.mrf.mxu0
        %v689 = vadd.f32 %v482, %v688
        %v690 = vand.u32 %v375, 4294901760
        %691 = vmatmul.f32.gmra.mxu0 %v690
        %v692 = vpop.f32.mrf.mxu0
        %v693 = vadd.f32 %v490, %v692
        %v694 = vand.u32 %v378, 4294901760
        %695 = vmatmul.f32.gmra.mxu0 %v694
        %v696 = vpop.f32.mrf.mxu0
        %v697 = vadd.f32 %v498, %v696
        %v698 = vand.u32 %v381, 4294901760
        %699 = vmatmul.f32.gmra.mxu0 %v698
        %v700 = vpop.f32.mrf.mxu0
        %v701 = vadd.f32 %v506, %v700
        %v702 = vand.u32 %v384, 4294901760
        %703 = vmatmul.f32.gmra.mxu0 %v702
        %v704 = vpop.f32.mrf.mxu0
        %v705 = vadd.f32 %v514, %v704
        %v706 = vand.u32 %v387, 4294901760
        %707 = vmatmul.f32.gmra.mxu0 %v706
        %v708 = vpop.f32.mrf.mxu0
        %v709 = vadd.f32 %v522, %v708
        %v710 = vand.u32 %v390, 4294901760
        %711 = vmatmul.f32.gmra.mxu0 %v710
        %v712 = vpop.f32.mrf.mxu0
        %v713 = vadd.f32 %v530, %v712
        %v714 = vand.u32 %v393, 4294901760
        %715 = vmatmul.f32.gmra.mxu0 %v714
        %v716 = vpop.f32.mrf.mxu0
        %v717 = vadd.f32 %v538, %v716
        %v718 = vand.u32 %v396, 4294901760
        %719 = vmatmul.f32.gmra.mxu0 %v718
        %v720 = vpop.f32.mrf.mxu0
        %v721 = vadd.f32 %v546, %v720
        %v722 = vand.u32 %v399, 4294901760
        %723 = vmatmul.f32.gmra.mxu0 %v722
        %v724 = vpop.f32.mrf.mxu0
        %v725 = vadd.f32 %v554, %v724
        %v726 = vand.u32 %v402, 4294901760
        %727 = vmatmul.f32.gmra.mxu0 %v726
        %v728 = vpop.f32.mrf.mxu0
        %v729 = vadd.f32 %v562, %v728
        %v730 = vand.u32 %v405, 4294901760
        %731 = vmatmul.f32.gmra.mxu0 %v730
        %v732 = vpop.f32.mrf.mxu0
        %v733 = vadd.f32 %v570, %v732
        %v734 = vand.u32 %v408, 4294901760
        %735 = vmatmul.f32.gmra.mxu0 %v734
        %v736 = vpop.f32.mrf.mxu0
        %v737 = vadd.f32 %v578, %v736
        %v738 = vand.u32 %v411, 4294901760
        %739 = vmatmul.f32.gmra.mxu0 %v738
        %v740 = vpop.f32.mrf.mxu0
        %v741 = vadd.f32 %v586, %v740
        %v742 = vand.u32 %v414, 4294901760
        %743 = vmatmul.f32.gmra.mxu0 %v742
        %v744 = vpop.f32.mrf.mxu0
        %v745 = vadd.f32 %v594, %v744
        %v746 = vand.u32 %v417, 4294901760
        %747 = vmatmul.f32.gmra.mxu0 %v746
        %v748 = vpop.f32.mrf.mxu0
        %v749 = vadd.f32 %v602, %v748
        %v750 = vand.u32 %v420, 4294901760
        %751 = vmatmul.f32.gmra.mxu0 %v750
        %v752 = vpop.f32.mrf.mxu0
        %v753 = vadd.f32 %v610, %v752
        %v754 = vand.u32 %v423, 4294901760
        %755 = vmatmul.f32.gmra.mxu0 %v754
        %v756 = vpop.f32.mrf.mxu0
        %v757 = vadd.f32 %v618, %v756
        %v758 = vand.u32 %v426, 4294901760
        %759 = vmatmul.f32.gmra.mxu0 %v758
        %v760 = vpop.f32.mrf.mxu0
        %v761 = vadd.f32 %v626, %v760
        %v762 = vand.u32 %v429, 4294901760
        %763 = vmatmul.f32.gmra.mxu0 %v762
        %v764 = vpop.f32.mrf.mxu0
        %v765 = vadd.f32 %v634, %v764
        %v766 = vand.u32 %v432, 4294901760
        %767 = vmatmul.f32.gmra.mxu0 %v766
        %v768 = vpop.f32.mrf.mxu0
        %v769 = vadd.f32 %v642, %v768
        %v770 = vand.u32 %v435, 4294901760
        %771 = vmatmul.f32.gmra.mxu0 %v770
        %v772 = vpop.f32.mrf.mxu0
        %v773 = vadd.f32 %v650, %v772
        %774 = vdwg.mxu0
        %775 = vmatpush.msra.mxu0 0.0
        %776 = vmatpush.msra.mxu0 0.0
        %777 = vmatpush.msra.mxu0 0.0
        %778 = vmatpush.msra.mxu0 0.0
        %779 = vmatpush.msra.mxu0 0.0
        %780 = vmatpush.msra.mxu0 0.0
        %781 = vmatpush.msra.mxu0 0.0
        %782 = vmatpush.msra.mxu0 0.0
        %783 = vmatpush.msra.mxu0 0.0
        %784 = vmatpush.msra.mxu0 0.0
        %785 = vmatpush.msra.mxu0 0.0
        %786 = vmatpush.msra.mxu0 0.0
        %787 = vmatpush.msra.mxu0 0.0
        %788 = vmatpush.msra.mxu0 0.0
        %v789 = vand.u32 %v439, 4294901760
        %v790 = vsub.f32 %v439, %v789
        %791 = vmatpush.msra.mxu0 %v790
        %v792 = vand.u32 %v218, 4294901760
        %v793 = vsub.f32 %v218, %v792
        %794 = vmatpush.msra.mxu0 %v793
        %v795 = vand.u32 %v366, 4294901760
        %v796 = vsub.f32 %v366, %v795
        %797 = vmatmul.f32.gmra.mxu0 %v796
        %v798 = vpop.f32.mrf.mxu0
        %v799 = vadd.f32 %v681, %v798
        %v800 = vand.u32 %v369, 4294901760
        %v801 = vsub.f32 %v369, %v800
        %802 = vmatmul.f32.gmra.mxu0 %v801
        %v803 = vpop.f32.mrf.mxu0
        %v804 = vadd.f32 %v685, %v803
        %v805 = vand.u32 %v372, 4294901760
        %v806 = vsub.f32 %v372, %v805
        %807 = vmatmul.f32.gmra.mxu0 %v806
        %v808 = vpop.f32.mrf.mxu0
        %v809 = vadd.f32 %v689, %v808
        %v810 = vand.u32 %v375, 4294901760
        %v811 = vsub.f32 %v375, %v810
        %812 = vmatmul.f32.gmra.mxu0 %v811
        %v813 = vpop.f32.mrf.mxu0
        %v814 = vadd.f32 %v693, %v813
        %v815 = vand.u32 %v378, 4294901760
        %v816 = vsub.f32 %v378, %v815
        %817 = vmatmul.f32.gmra.mxu0 %v816
        %v818 = vpop.f32.mrf.mxu0
        %v819 = vadd.f32 %v697, %v818
        %v820 = vand.u32 %v381, 4294901760
        %v821 = vsub.f32 %v381, %v820
        %822 = vmatmul.f32.gmra.mxu0 %v821
        %v823 = vpop.f32.mrf.mxu0
        %v824 = vadd.f32 %v701, %v823
        %v825 = vand.u32 %v384, 4294901760
        %v826 = vsub.f32 %v384, %v825
        %827 = vmatmul.f32.gmra.mxu0 %v826
        %v828 = vpop.f32.mrf.mxu0
        %v829 = vadd.f32 %v705, %v828
        %v830 = vand.u32 %v387, 4294901760
        %v831 = vsub.f32 %v387, %v830
        %832 = vmatmul.f32.gmra.mxu0 %v831
        %v833 = vpop.f32.mrf.mxu0
        %v834 = vadd.f32 %v709, %v833
        %v835 = vand.u32 %v390, 4294901760
        %v836 = vsub.f32 %v390, %v835
        %837 = vmatmul.f32.gmra.mxu0 %v836
        %v838 = vpop.f32.mrf.mxu0
        %v839 = vadd.f32 %v713, %v838
        %v840 = vand.u32 %v393, 4294901760
        %v841 = vsub.f32 %v393, %v840
        %842 = vmatmul.f32.gmra.mxu0 %v841
        %v843 = vpop.f32.mrf.mxu0
        %v844 = vadd.f32 %v717, %v843
        %v845 = vand.u32 %v396, 4294901760
        %v846 = vsub.f32 %v396, %v845
        %847 = vmatmul.f32.gmra.mxu0 %v846
        %v848 = vpop.f32.mrf.mxu0
        %v849 = vadd.f32 %v721, %v848
        %v850 = vand.u32 %v399, 4294901760
        %v851 = vsub.f32 %v399, %v850
        %852 = vmatmul.f32.gmra.mxu0 %v851
        %v853 = vpop.f32.mrf.mxu0
        %v854 = vadd.f32 %v725, %v853
        %v855 = vand.u32 %v402, 4294901760
        %v856 = vsub.f32 %v402, %v855
        %857 = vmatmul.f32.gmra.mxu0 %v856
        %v858 = vpop.f32.mrf.mxu0
        %v859 = vadd.f32 %v729, %v858
        %v860 = vand.u32 %v405, 4294901760
        %v861 = vsub.f32 %v405, %v860
        %862 = vmatmul.f32.gmra.mxu0 %v861
        %v863 = vpop.f32.mrf.mxu0
        %v864 = vadd.f32 %v733, %v863
        %v865 = vand.u32 %v408, 4294901760
        %v866 = vsub.f32 %v408, %v865
        %867 = vmatmul.f32.gmra.mxu0 %v866
        %v868 = vpop.f32.mrf.mxu0
        %v869 = vadd.f32 %v737, %v868
        %v870 = vand.u32 %v411, 4294901760
        %v871 = vsub.f32 %v411, %v870
        %872 = vmatmul.f32.gmra.mxu0 %v871
        %v873 = vpop.f32.mrf.mxu0
        %v874 = vadd.f32 %v741, %v873
        %v875 = vand.u32 %v414, 4294901760
        %v876 = vsub.f32 %v414, %v875
        %877 = vmatmul.f32.gmra.mxu0 %v876
        %v878 = vpop.f32.mrf.mxu0
        %v879 = vadd.f32 %v745, %v878
        %v880 = vand.u32 %v417, 4294901760
        %v881 = vsub.f32 %v417, %v880
        %882 = vmatmul.f32.gmra.mxu0 %v881
        %v883 = vpop.f32.mrf.mxu0
        %v884 = vadd.f32 %v749, %v883
        %v885 = vand.u32 %v420, 4294901760
        %v886 = vsub.f32 %v420, %v885
        %887 = vmatmul.f32.gmra.mxu0 %v886
        %v888 = vpop.f32.mrf.mxu0
        %v889 = vadd.f32 %v753, %v888
        %v890 = vand.u32 %v423, 4294901760
        %v891 = vsub.f32 %v423, %v890
        %892 = vmatmul.f32.gmra.mxu0 %v891
        %v893 = vpop.f32.mrf.mxu0
        %v894 = vadd.f32 %v757, %v893
        %v895 = vand.u32 %v426, 4294901760
        %v896 = vsub.f32 %v426, %v895
        %897 = vmatmul.f32.gmra.mxu0 %v896
        %v898 = vpop.f32.mrf.mxu0
        %v899 = vadd.f32 %v761, %v898
        %v900 = vand.u32 %v429, 4294901760
        %v901 = vsub.f32 %v429, %v900
        %902 = vmatmul.f32.gmra.mxu0 %v901
        %v903 = vpop.f32.mrf.mxu0
        %v904 = vadd.f32 %v765, %v903
        %v905 = vand.u32 %v432, 4294901760
        %v906 = vsub.f32 %v432, %v905
        %907 = vmatmul.f32.gmra.mxu0 %v906
        %v908 = vpop.f32.mrf.mxu0
        %v909 = vadd.f32 %v769, %v908
        %v910 = vand.u32 %v435, 4294901760
        %v911 = vsub.f32 %v435, %v910
        %912 = vmatmul.f32.gmra.mxu0 %v911
        %v913 = vpop.f32.mrf.mxu0
        %v914 = vadd.f32 %v773, %v913
        %915 = vdwg.mxu0
        %916 = vmatpush.msra.mxu0 0.0
        %917 = vmatpush.msra.mxu0 0.0
        %918 = vmatpush.msra.mxu0 0.0
        %919 = vmatpush.msra.mxu0 0.0
        %920 = vmatpush.msra.mxu0 0.0
        %921 = vmatpush.msra.mxu0 0.0
        %922 = vmatpush.msra.mxu0 0.0
        %923 = vmatpush.msra.mxu0 0.0
        %924 = vmatpush.msra.mxu0 0.0
        %925 = vmatpush.msra.mxu0 0.0
        %926 = vmatpush.msra.mxu0 0.0
        %927 = vmatpush.msra.mxu0 0.0
        %928 = vmatpush.msra.mxu0 0.0
        %929 = vmatpush.msra.mxu0 0.0
        %v930 = vand.u32 %v439, 4294901760
        %931 = vmatpush.msra.mxu0 %v930
        %v932 = vand.u32 %v218, 4294901760
        %933 = vmatpush.msra.mxu0 %v932
        %v934 = vand.u32 %v366, 4294901760
        %v935 = vsub.f32 %v366, %v934
        %v936 = vand.u32 %v935, 4294901760
        %937 = vmatmul.f32.gmra.mxu0 %v936
        %v938 = vpop.f32.mrf.mxu0
        %v939 = vadd.f32 %v799, %v938
        %v940 = vand.u32 %v369, 4294901760
        %v941 = vsub.f32 %v369, %v940
        %v942 = vand.u32 %v941, 4294901760
        %943 = vmatmul.f32.gmra.mxu0 %v942
        %v944 = vpop.f32.mrf.mxu0
        %v945 = vadd.f32 %v804, %v944
        %v946 = vand.u32 %v372, 4294901760
        %v947 = vsub.f32 %v372, %v946
        %v948 = vand.u32 %v947, 4294901760
        %949 = vmatmul.f32.gmra.mxu0 %v948
        %v950 = vpop.f32.mrf.mxu0
        %v951 = vadd.f32 %v809, %v950
        %v952 = vand.u32 %v375, 4294901760
        %v953 = vsub.f32 %v375, %v952
        %v954 = vand.u32 %v953, 4294901760
        %955 = vmatmul.f32.gmra.mxu0 %v954
        %v956 = vpop.f32.mrf.mxu0
        %v957 = vadd.f32 %v814, %v956
        %v958 = vand.u32 %v378, 4294901760
        %v959 = vsub.f32 %v378, %v958
        %v960 = vand.u32 %v959, 4294901760
        %961 = vmatmul.f32.gmra.mxu0 %v960
        %v962 = vpop.f32.mrf.mxu0
        %v963 = vadd.f32 %v819, %v962
        %v964 = vand.u32 %v381, 4294901760
        %v965 = vsub.f32 %v381, %v964
        %v966 = vand.u32 %v965, 4294901760
        %967 = vmatmul.f32.gmra.mxu0 %v966
        %v968 = vpop.f32.mrf.mxu0
        %v969 = vadd.f32 %v824, %v968
        %v970 = vand.u32 %v384, 4294901760
        %v971 = vsub.f32 %v384, %v970
        %v972 = vand.u32 %v971, 4294901760
        %973 = vmatmul.f32.gmra.mxu0 %v972
        %v974 = vpop.f32.mrf.mxu0
        %v975 = vadd.f32 %v829, %v974
        %v976 = vand.u32 %v387, 4294901760
        %v977 = vsub.f32 %v387, %v976
        %v978 = vand.u32 %v977, 4294901760
        %979 = vmatmul.f32.gmra.mxu0 %v978
        %v980 = vpop.f32.mrf.mxu0
        %v981 = vadd.f32 %v834, %v980
        %v982 = vand.u32 %v390, 4294901760
        %v983 = vsub.f32 %v390, %v982
        %v984 = vand.u32 %v983, 4294901760
        %985 = vmatmul.f32.gmra.mxu0 %v984
        %v986 = vpop.f32.mrf.mxu0
        %v987 = vadd.f32 %v839, %v986
        %v988 = vand.u32 %v393, 4294901760
        %v989 = vsub.f32 %v393, %v988
        %v990 = vand.u32 %v989, 4294901760
        %991 = vmatmul.f32.gmra.mxu0 %v990
        %v992 = vpop.f32.mrf.mxu0
        %v993 = vadd.f32 %v844, %v992
        %v994 = vand.u32 %v396, 4294901760
        %v995 = vsub.f32 %v396, %v994
        %v996 = vand.u32 %v995, 4294901760
        %997 = vmatmul.f32.gmra.mxu0 %v996
        %v998 = vpop.f32.mrf.mxu0
        %v999 = vadd.f32 %v849, %v998
        %v1000 = vand.u32 %v399, 4294901760
        %v1001 = vsub.f32 %v399, %v1000
        %v1002 = vand.u32 %v1001, 4294901760
        %1003 = vmatmul.f32.gmra.mxu0 %v1002
        %v1004 = vpop.f32.mrf.mxu0
        %v1005 = vadd.f32 %v854, %v1004
        %v1006 = vand.u32 %v402, 4294901760
        %v1007 = vsub.f32 %v402, %v1006
        %v1008 = vand.u32 %v1007, 4294901760
        %1009 = vmatmul.f32.gmra.mxu0 %v1008
        %v1010 = vpop.f32.mrf.mxu0
        %v1011 = vadd.f32 %v859, %v1010
        %v1012 = vand.u32 %v405, 4294901760
        %v1013 = vsub.f32 %v405, %v1012
        %v1014 = vand.u32 %v1013, 4294901760
        %1015 = vmatmul.f32.gmra.mxu0 %v1014
        %v1016 = vpop.f32.mrf.mxu0
        %v1017 = vadd.f32 %v864, %v1016
        %v1018 = vand.u32 %v408, 4294901760
        %v1019 = vsub.f32 %v408, %v1018
        %v1020 = vand.u32 %v1019, 4294901760
        %1021 = vmatmul.f32.gmra.mxu0 %v1020
        %v1022 = vpop.f32.mrf.mxu0
        %v1023 = vadd.f32 %v869, %v1022
        %v1024 = vand.u32 %v411, 4294901760
        %v1025 = vsub.f32 %v411, %v1024
        %v1026 = vand.u32 %v1025, 4294901760
        %1027 = vmatmul.f32.gmra.mxu0 %v1026
        %v1028 = vpop.f32.mrf.mxu0
        %v1029 = vadd.f32 %v874, %v1028
        %v1030 = vand.u32 %v414, 4294901760
        %v1031 = vsub.f32 %v414, %v1030
        %v1032 = vand.u32 %v1031, 4294901760
        %1033 = vmatmul.f32.gmra.mxu0 %v1032
        %v1034 = vpop.f32.mrf.mxu0
        %v1035 = vadd.f32 %v879, %v1034
        %v1036 = vand.u32 %v417, 4294901760
        %v1037 = vsub.f32 %v417, %v1036
        %v1038 = vand.u32 %v1037, 4294901760
        %1039 = vmatmul.f32.gmra.mxu0 %v1038
        %v1040 = vpop.f32.mrf.mxu0
        %v1041 = vadd.f32 %v884, %v1040
        %v1042 = vand.u32 %v420, 4294901760
        %v1043 = vsub.f32 %v420, %v1042
        %v1044 = vand.u32 %v1043, 4294901760
        %1045 = vmatmul.f32.gmra.mxu0 %v1044
        %v1046 = vpop.f32.mrf.mxu0
        %v1047 = vadd.f32 %v889, %v1046
        %v1048 = vand.u32 %v423, 4294901760
        %v1049 = vsub.f32 %v423, %v1048
        %v1050 = vand.u32 %v1049, 4294901760
        %1051 = vmatmul.f32.gmra.mxu0 %v1050
        %v1052 = vpop.f32.mrf.mxu0
        %v1053 = vadd.f32 %v894, %v1052
        %v1054 = vand.u32 %v426, 4294901760
        %v1055 = vsub.f32 %v426, %v1054
        %v1056 = vand.u32 %v1055, 4294901760
        %1057 = vmatmul.f32.gmra.mxu0 %v1056
        %v1058 = vpop.f32.mrf.mxu0
        %v1059 = vadd.f32 %v899, %v1058
        %v1060 = vand.u32 %v429, 4294901760
        %v1061 = vsub.f32 %v429, %v1060
        %v1062 = vand.u32 %v1061, 4294901760
        %1063 = vmatmul.f32.gmra.mxu0 %v1062
        %v1064 = vpop.f32.mrf.mxu0
        %v1065 = vadd.f32 %v904, %v1064
        %v1066 = vand.u32 %v432, 4294901760
        %v1067 = vsub.f32 %v432, %v1066
        %v1068 = vand.u32 %v1067, 4294901760
        %1069 = vmatmul.f32.gmra.mxu0 %v1068
        %v1070 = vpop.f32.mrf.mxu0
        %v1071 = vadd.f32 %v909, %v1070
        %v1072 = vand.u32 %v435, 4294901760
        %v1073 = vsub.f32 %v435, %v1072
        %v1074 = vand.u32 %v1073, 4294901760
        %1075 = vmatmul.f32.gmra.mxu0 %v1074
        %v1076 = vpop.f32.mrf.mxu0
        %v1077 = vadd.f32 %v914, %v1076
        %1078 = vdwg.mxu0
        %1079 = vmatpush.msra.mxu0 0.0
        %1080 = vmatpush.msra.mxu0 0.0
        %1081 = vmatpush.msra.mxu0 0.0
        %1082 = vmatpush.msra.mxu0 0.0
        %1083 = vmatpush.msra.mxu0 0.0
        %1084 = vmatpush.msra.mxu0 0.0
        %1085 = vmatpush.msra.mxu0 0.0
        %1086 = vmatpush.msra.mxu0 0.0
        %1087 = vmatpush.msra.mxu0 0.0
        %1088 = vmatpush.msra.mxu0 0.0
        %1089 = vmatpush.msra.mxu0 0.0
        %1090 = vmatpush.msra.mxu0 0.0
        %1091 = vmatpush.msra.mxu0 0.0
        %1092 = vmatpush.msra.mxu0 0.0
        %v1093 = vand.u32 %v439, 4294901760
        %v1094 = vsub.f32 %v439, %v1093
        %v1095 = vand.u32 %v1094, 4294901760
        %1096 = vmatpush.msra.mxu0 %v1095
        %v1097 = vand.u32 %v218, 4294901760
        %v1098 = vsub.f32 %v218, %v1097
        %v1099 = vand.u32 %v1098, 4294901760
        %1100 = vmatpush.msra.mxu0 %v1099
        %v1101 = vand.u32 %v366, 4294901760
        %1102 = vmatmul.f32.gmra.mxu0 %v1101
        %v1103 = vpop.f32.mrf.mxu0
        %v1104 = vadd.f32 %v939, %v1103
        %v1105 = vand.u32 %v369, 4294901760
        %1106 = vmatmul.f32.gmra.mxu0 %v1105
        %v1107 = vpop.f32.mrf.mxu0
        %v1108 = vadd.f32 %v945, %v1107
        %v1109 = vand.u32 %v372, 4294901760
        %1110 = vmatmul.f32.gmra.mxu0 %v1109
        %v1111 = vpop.f32.mrf.mxu0
        %v1112 = vadd.f32 %v951, %v1111
        %v1113 = vand.u32 %v375, 4294901760
        %1114 = vmatmul.f32.gmra.mxu0 %v1113
        %v1115 = vpop.f32.mrf.mxu0
        %v1116 = vadd.f32 %v957, %v1115
        %v1117 = vand.u32 %v378, 4294901760
        %1118 = vmatmul.f32.gmra.mxu0 %v1117
        %v1119 = vpop.f32.mrf.mxu0
        %v1120 = vadd.f32 %v963, %v1119
        %v1121 = vand.u32 %v381, 4294901760
        %1122 = vmatmul.f32.gmra.mxu0 %v1121
        %v1123 = vpop.f32.mrf.mxu0
        %v1124 = vadd.f32 %v969, %v1123
        %v1125 = vand.u32 %v384, 4294901760
        %1126 = vmatmul.f32.gmra.mxu0 %v1125
        %v1127 = vpop.f32.mrf.mxu0
        %v1128 = vadd.f32 %v975, %v1127
        %v1129 = vand.u32 %v387, 4294901760
        %1130 = vmatmul.f32.gmra.mxu0 %v1129
        %v1131 = vpop.f32.mrf.mxu0
        %v1132 = vadd.f32 %v981, %v1131
        %v1133 = vand.u32 %v390, 4294901760
        %1134 = vmatmul.f32.gmra.mxu0 %v1133
        %v1135 = vpop.f32.mrf.mxu0
        %v1136 = vadd.f32 %v987, %v1135
        %v1137 = vand.u32 %v393, 4294901760
        %1138 = vmatmul.f32.gmra.mxu0 %v1137
        %v1139 = vpop.f32.mrf.mxu0
        %v1140 = vadd.f32 %v993, %v1139
        %v1141 = vand.u32 %v396, 4294901760
        %1142 = vmatmul.f32.gmra.mxu0 %v1141
        %v1143 = vpop.f32.mrf.mxu0
        %v1144 = vadd.f32 %v999, %v1143
        %v1145 = vand.u32 %v399, 4294901760
        %1146 = vmatmul.f32.gmra.mxu0 %v1145
        %v1147 = vpop.f32.mrf.mxu0
        %v1148 = vadd.f32 %v1005, %v1147
        %v1149 = vand.u32 %v402, 4294901760
        %1150 = vmatmul.f32.gmra.mxu0 %v1149
        %v1151 = vpop.f32.mrf.mxu0
        %v1152 = vadd.f32 %v1011, %v1151
        %v1153 = vand.u32 %v405, 4294901760
        %1154 = vmatmul.f32.gmra.mxu0 %v1153
        %v1155 = vpop.f32.mrf.mxu0
        %v1156 = vadd.f32 %v1017, %v1155
        %v1157 = vand.u32 %v408, 4294901760
        %1158 = vmatmul.f32.gmra.mxu0 %v1157
        %v1159 = vpop.f32.mrf.mxu0
        %v1160 = vadd.f32 %v1023, %v1159
        %v1161 = vand.u32 %v411, 4294901760
        %1162 = vmatmul.f32.gmra.mxu0 %v1161
        %v1163 = vpop.f32.mrf.mxu0
        %v1164 = vadd.f32 %v1029, %v1163
        %v1165 = vand.u32 %v414, 4294901760
        %1166 = vmatmul.f32.gmra.mxu0 %v1165
        %v1167 = vpop.f32.mrf.mxu0
        %v1168 = vadd.f32 %v1035, %v1167
        %v1169 = vand.u32 %v417, 4294901760
        %1170 = vmatmul.f32.gmra.mxu0 %v1169
        %v1171 = vpop.f32.mrf.mxu0
        %v1172 = vadd.f32 %v1041, %v1171
        %v1173 = vand.u32 %v420, 4294901760
        %1174 = vmatmul.f32.gmra.mxu0 %v1173
        %v1175 = vpop.f32.mrf.mxu0
        %v1176 = vadd.f32 %v1047, %v1175
        %v1177 = vand.u32 %v423, 4294901760
        %1178 = vmatmul.f32.gmra.mxu0 %v1177
        %v1179 = vpop.f32.mrf.mxu0
        %v1180 = vadd.f32 %v1053, %v1179
        %v1181 = vand.u32 %v426, 4294901760
        %1182 = vmatmul.f32.gmra.mxu0 %v1181
        %v1183 = vpop.f32.mrf.mxu0
        %v1184 = vadd.f32 %v1059, %v1183
        %v1185 = vand.u32 %v429, 4294901760
        %1186 = vmatmul.f32.gmra.mxu0 %v1185
        %v1187 = vpop.f32.mrf.mxu0
        %v1188 = vadd.f32 %v1065, %v1187
        %v1189 = vand.u32 %v432, 4294901760
        %1190 = vmatmul.f32.gmra.mxu0 %v1189
        %v1191 = vpop.f32.mrf.mxu0
        %v1192 = vadd.f32 %v1071, %v1191
        %v1193 = vand.u32 %v435, 4294901760
        %1194 = vmatmul.f32.gmra.mxu0 %v1193
        %v1195 = vpop.f32.mrf.mxu0
        %v1196 = vadd.f32 %v1077, %v1195
        %1197 = vdwg.mxu0
        %1198 = vmatpush.msra.mxu0 0.0
        %1199 = vmatpush.msra.mxu0 0.0
        %1200 = vmatpush.msra.mxu0 0.0
        %1201 = vmatpush.msra.mxu0 0.0
        %1202 = vmatpush.msra.mxu0 0.0
        %1203 = vmatpush.msra.mxu0 0.0
        %1204 = vmatpush.msra.mxu0 0.0
        %1205 = vmatpush.msra.mxu0 0.0
        %1206 = vmatpush.msra.mxu0 0.0
        %1207 = vmatpush.msra.mxu0 0.0
        %1208 = vmatpush.msra.mxu0 0.0
        %1209 = vmatpush.msra.mxu0 0.0
        %1210 = vmatpush.msra.mxu0 0.0
        %1211 = vmatpush.msra.mxu0 0.0
        %v1212 = vand.u32 %v439, 4294901760
        %1213 = vmatpush.msra.mxu0 %v1212
        %v1214 = vand.u32 %v218, 4294901760
        %1215 = vmatpush.msra.mxu0 %v1214
        %v1216 = vand.u32 %v366, 4294901760
        %1217 = vmatmul.f32.gmra.mxu0 %v1216
        %v1218 = vpop.f32.mrf.mxu0
        %v1219 = vadd.f32 %v1104, %v1218
        %v1220 = vand.u32 %v369, 4294901760
        %1221 = vmatmul.f32.gmra.mxu0 %v1220
        %v1222 = vpop.f32.mrf.mxu0
        %v1223 = vadd.f32 %v1108, %v1222
        %v1224 = vand.u32 %v372, 4294901760
        %1225 = vmatmul.f32.gmra.mxu0 %v1224
        %v1226 = vpop.f32.mrf.mxu0
        %v1227 = vadd.f32 %v1112, %v1226
        %v1228 = vand.u32 %v375, 4294901760
        %1229 = vmatmul.f32.gmra.mxu0 %v1228
        %v1230 = vpop.f32.mrf.mxu0
        %v1231 = vadd.f32 %v1116, %v1230
        %v1232 = vand.u32 %v378, 4294901760
        %1233 = vmatmul.f32.gmra.mxu0 %v1232
        %v1234 = vpop.f32.mrf.mxu0
        %v1235 = vadd.f32 %v1120, %v1234
        %v1236 = vand.u32 %v381, 4294901760
        %1237 = vmatmul.f32.gmra.mxu0 %v1236
        %v1238 = vpop.f32.mrf.mxu0
        %v1239 = vadd.f32 %v1124, %v1238
        %v1240 = vand.u32 %v384, 4294901760
        %1241 = vmatmul.f32.gmra.mxu0 %v1240
        %v1242 = vpop.f32.mrf.mxu0
        %v1243 = vadd.f32 %v1128, %v1242
        %v1244 = vand.u32 %v387, 4294901760
        %1245 = vmatmul.f32.gmra.mxu0 %v1244
        %v1246 = vpop.f32.mrf.mxu0
        %v1247 = vadd.f32 %v1132, %v1246
        %v1248 = vand.u32 %v390, 4294901760
        %1249 = vmatmul.f32.gmra.mxu0 %v1248
        %v1250 = vpop.f32.mrf.mxu0
        %v1251 = vadd.f32 %v1136, %v1250
        %v1252 = vand.u32 %v393, 4294901760
        %1253 = vmatmul.f32.gmra.mxu0 %v1252
        %v1254 = vpop.f32.mrf.mxu0
        %v1255 = vadd.f32 %v1140, %v1254
        %v1256 = vand.u32 %v396, 4294901760
        %1257 = vmatmul.f32.gmra.mxu0 %v1256
        %v1258 = vpop.f32.mrf.mxu0
        %v1259 = vadd.f32 %v1144, %v1258
        %v1260 = vand.u32 %v399, 4294901760
        %1261 = vmatmul.f32.gmra.mxu0 %v1260
        %v1262 = vpop.f32.mrf.mxu0
        %v1263 = vadd.f32 %v1148, %v1262
        %v1264 = vand.u32 %v402, 4294901760
        %1265 = vmatmul.f32.gmra.mxu0 %v1264
        %v1266 = vpop.f32.mrf.mxu0
        %v1267 = vadd.f32 %v1152, %v1266
        %v1268 = vand.u32 %v405, 4294901760
        %1269 = vmatmul.f32.gmra.mxu0 %v1268
        %v1270 = vpop.f32.mrf.mxu0
        %v1271 = vadd.f32 %v1156, %v1270
        %v1272 = vand.u32 %v408, 4294901760
        %1273 = vmatmul.f32.gmra.mxu0 %v1272
        %v1274 = vpop.f32.mrf.mxu0
        %v1275 = vadd.f32 %v1160, %v1274
        %v1276 = vand.u32 %v411, 4294901760
        %1277 = vmatmul.f32.gmra.mxu0 %v1276
        %v1278 = vpop.f32.mrf.mxu0
        %v1279 = vadd.f32 %v1164, %v1278
        %v1280 = vand.u32 %v414, 4294901760
        %1281 = vmatmul.f32.gmra.mxu0 %v1280
        %v1282 = vpop.f32.mrf.mxu0
        %v1283 = vadd.f32 %v1168, %v1282
        %v1284 = vand.u32 %v417, 4294901760
        %1285 = vmatmul.f32.gmra.mxu0 %v1284
        %v1286 = vpop.f32.mrf.mxu0
        %v1287 = vadd.f32 %v1172, %v1286
        %v1288 = vand.u32 %v420, 4294901760
        %1289 = vmatmul.f32.gmra.mxu0 %v1288
        %v1290 = vpop.f32.mrf.mxu0
        %v1291 = vadd.f32 %v1176, %v1290
        %v1292 = vand.u32 %v423, 4294901760
        %1293 = vmatmul.f32.gmra.mxu0 %v1292
        %v1294 = vpop.f32.mrf.mxu0
        %v1295 = vadd.f32 %v1180, %v1294
        %v1296 = vand.u32 %v426, 4294901760
        %1297 = vmatmul.f32.gmra.mxu0 %v1296
        %v1298 = vpop.f32.mrf.mxu0
        %v1299 = vadd.f32 %v1184, %v1298
        %v1300 = vand.u32 %v429, 4294901760
        %1301 = vmatmul.f32.gmra.mxu0 %v1300
        %v1302 = vpop.f32.mrf.mxu0
        %v1303 = vadd.f32 %v1188, %v1302
        %v1304 = vand.u32 %v432, 4294901760
        %1305 = vmatmul.f32.gmra.mxu0 %v1304
        %v1306 = vpop.f32.mrf.mxu0
        %v1307 = vadd.f32 %v1192, %v1306
        %v1308 = vand.u32 %v435, 4294901760
        %1309 = vmatmul.f32.gmra.mxu0 %v1308
        %v1310 = vpop.f32.mrf.mxu0
        %v1311 = vadd.f32 %v1196, %v1310
        %1312 = vdwg.mxu0
        %v1313 = vmax.f32 %v1219, 0.0
        %v1314 = vmax.f32 %v1223, 0.0
        %v1315 = vmax.f32 %v1227, 0.0
        %v1316 = vmax.f32 %v1231, 0.0
        %v1317 = vmax.f32 %v1235, 0.0
        %v1318 = vmax.f32 %v1239, 0.0
        %v1319 = vmax.f32 %v1243, 0.0
        %v1320 = vmax.f32 %v1247, 0.0
        %v1321 = vmax.f32 %v1251, 0.0
        %v1322 = vmax.f32 %v1255, 0.0
        %v1323 = vmax.f32 %v1259, 0.0
        %v1324 = vmax.f32 %v1263, 0.0
        %v1325 = vadd.f32 %v1313, %v1267
        %v1326 = vadd.f32 %v1314, %v1271
        %v1327 = vadd.f32 %v1315, %v1275
        %v1328 = vadd.f32 %v1316, %v1279
        %v1329 = vadd.f32 %v1317, %v1283
        %v1330 = vadd.f32 %v1318, %v1287
        %v1331 = vadd.f32 %v1319, %v1291
        %v1332 = vadd.f32 %v1320, %v1295
        %v1333 = vadd.f32 %v1321, %v1299
        %v1334 = vadd.f32 %v1322, %v1303
        %v1335 = vadd.f32 %v1323, %v1307
        %v1336 = vadd.f32 %v1324, %v1311
        %v1337 = vmax.f32 %v1325, 0.0
        %v1338 = vmax.f32 %v1326, 0.0
        %v1339 = vmax.f32 %v1327, 0.0
        %v1340 = vmax.f32 %v1328, 0.0
        %v1341 = vmax.f32 %v1329, 0.0
        %v1342 = vmax.f32 %v1330, 0.0
        %v1343 = vmax.f32 %v1331, 0.0
        %v1344 = vmax.f32 %v1332, 0.0
        %v1345 = vmax.f32 %v1333, 0.0
        %v1346 = vmax.f32 %v1334, 0.0
        %v1347 = vmax.f32 %v1335, 0.0
        %v1348 = vmax.f32 %v1336, 0.0
        %1349 = vst [vmem:[%s185] sm:$0xff] %v1337
        %1350 = vst [vmem:[%s185 + $0x8] sm:$0xff] %v1338
        %1351 = vst [vmem:[%s185 + $0x10] sm:$0xff] %v1339
        %1352 = vst [vmem:[%s185 + $0x18] sm:$0xff] %v1340
        %1353 = vst [vmem:[%s185 + $0x20] sm:$0xff] %v1341
        %1354 = vst [vmem:[%s185 + $0x28] sm:$0xff] %v1342
        %1355 = vst [vmem:[%s185 + $0x30] sm:$0xff] %v1343
        %1356 = vst [vmem:[%s185 + $0x38] sm:$0xff] %v1344
        %1357 = vst [vmem:[%s185 + $0x40] sm:$0xff] %v1345
        %1358 = vst [vmem:[%s185 + $0x48] sm:$0xff] %v1346
        %1359 = vst [vmem:[%s185 + $0x50] sm:$0xff] %v1347
        %1360 = vst [vmem:[%s185 + $0x58] sm:$0xff] %v1348
        %s1361 = sand.u32 %s109, 1
        %s1362 = scalar_lea.sflag [#allocation3], %s1361
        %s1363 = sand.u32 %s109, 1
        %s1364 = smul.addr %s1363, 96
        %s1365 = scalar_lea.vmem [#allocation2], %s1364
        // Predicated region
        $region33: #{residual_block_forward.1} parent=31 // pred_check
          %p1366 = pneg %p119
        $region34: #{residual_block_forward.1} parent=31 // pred_check_branch
          %1368 = sbr.rel (%p1366) target = $region36
        $region35: #{residual_block_forward.1} parent=31 // pred_region
          %1370 = vsyncadd %s1362, 0
          %s1371 = smul.addr %s21, 12
          %s1372 = sadd.s32 %s22, %s1371
          %s1373 = smul.addr %s1372, 8
          %s1374 = scalar_lea.hbm %s3, %s1373
          %s1375 = sshll.u32 %s1365, 4
          %s1376 = int_to_ptr.vmem [resolvable:$true] %s1375
          %s1377 = sshll.u32 %s1374, 4
          %s1378 = int_to_ptr.hbm [resolvable:$true] %s1377
          %1383 = dma.vmem_to_hbm [thread:$0]  %s1376, 1536, %s1378, %s1362, 128, 128, 8
        $region36: #{residual_block_forward.1} parent=31 // pred_fallthru
          _
      $region32: #{residual_block_forward.1} parent=5 // pred_fallthru
        _
      %p1384 = scmp.le.s32.totalorder 2, %s12
      // Predicated region
      $region37: #{residual_block_forward.1} parent=5 // pred_check
        %p1385 = pneg %p1384
      $region38: #{residual_block_forward.1} parent=5 // pred_check_branch
        %1387 = sbr.rel (%p1385) target = $region40
      $region39: #{residual_block_forward.1} parent=5 // pred_region
        %s1388 = ssub.s32 %s12, 2
        // Predicated region
        $region41: #{residual_block_forward.1} parent=39 // pred_check
          %p1389 = pneg %p125
        $region42: #{residual_block_forward.1} parent=39 // pred_check_branch
          %1391 = sbr.rel (%p1389) target = $region44
        $region43: #{residual_block_forward.1} parent=39 // pred_region
          %s1392 = sand.u32 %s110, 1
          %s1393 = scalar_lea.sflag [#allocation3], %s1392
          %s1394 = sand.u32 %s110, 1
          %s1395 = smul.addr %s1394, 96
          %s1396 = scalar_lea.vmem [#allocation2], %s1395
          %1398 = dma.done %s1393, 1536
        $region44: #{residual_block_forward.1} parent=39 // pred_fallthru
          _
      $region40: #{residual_block_forward.1} parent=5 // pred_fallthru
        _
    $region6: #{residual_block_forward.1} parent=1 // loop_footer
      %s16 = sadd.s32 1, %s12
    $region7: #{residual_block_forward.1} parent=1 // loop_footer_branch
      %11 = sbr.rel target = $region3
    $region8: #{residual_block_forward.1} parent=1 // loop_exit
      _
    %1399 = vsyncpa [#allocation3], 1
    %s1400 = scalar_lea.sflag [#allocation3], 1
    %1401 = vsyncpa %s1400, 1

</llo_original>
